<compile_context>
chip_gen: v7x
topology: tpu7x:2x2x1
jax: 0.10.0
libtpu: 0.0.40
codegen_flags: <defaults>
</compile_context>

<pallas_src>
import functools

import jax
import jax.numpy as jnp
from jax.experimental import pallas as pl
from jax.experimental.pallas import tpu as pltpu

LANE = 128
NEG_BIG = -1e30  # bias fill for padded logit columns -> exp() == 0 (kept in f32)


def _round_up(n, m):
    return (n + m - 1) // m * m


def _pad2d(a, shape, fill=0.0):
    return jnp.pad(a, [(0, s - d) for d, s in zip(a.shape, shape)],
                   constant_values=fill)


def mlp_kernel(x_ref, w1_ref, w2_ref, w3_ref, b_ref, out_ref):
    n_out = out_ref.shape[-1]                 # static (2 for this module)
    bias = b_ref[...]                         # (8, w_p) f32, rows 0..2 used

    # fc1 + ReLU   (x cast to bf16 in-kernel; bf16 x bf16 -> f32 accumulate on MXU)
    x = x_ref[...].astype(jnp.bfloat16)       # (tb, in_size), true K width
    h = jnp.dot(x, w1_ref[...], preferred_element_type=jnp.float32)
    h = jnp.maximum(h + bias[0:1, :], 0.0).astype(jnp.bfloat16)

    # fc2 + ReLU
    h = jnp.dot(h, w2_ref[...], preferred_element_type=jnp.float32)
    h = jnp.maximum(h + bias[1:2, :], 0.0).astype(jnp.bfloat16)

    # fc3 (padded output columns carry bias = -1e30 -> vanish in the softmax)
    logits = jnp.dot(h, w3_ref[...], preferred_element_type=jnp.float32)
    logits = logits + bias[2:3, :]

    # numerically stable softmax over the lane-dense padded class axis;
    # exact normalization (approx reciprocal broke the sum-to-1 guarantee).
    m = jnp.max(logits, axis=1, keepdims=True)
    e = jnp.exp(logits - m)
    denom = jnp.sum(e, axis=1, keepdims=True)
    p = e / denom

    # narrow writeback: only the real class columns leave the chip
    out_ref[...] = p[:, :n_out]


def prepare_params(w1, b1, w2, b2, w3, b3):
    """Pad/cast the weights and pack the biases ONCE (call outside the hot path).
    w*: [in, out] (already transposed vs. nn.Linear); b*: [out]."""
    in_size, hidden = w1.shape
    n_out = w3.shape[1]
    w_p = max(_round_up(hidden, LANE), _round_up(n_out, LANE))  # shared padded width

    w1_p = _pad2d(w1, (in_size, w_p)).astype(jnp.bfloat16)  # keep true K = in_size
    w2_p = _pad2d(w2, (w_p, w_p)).astype(jnp.bfloat16)
    w3_p = _pad2d(w3, (w_p, w_p)).astype(jnp.bfloat16)

    b_pack = jnp.zeros((8, w_p), jnp.float32)
    b_pack = b_pack.at[0, :hidden].set(b1.reshape(-1))
    b_pack = b_pack.at[1, :hidden].set(b2.reshape(-1))
    b_pack = b_pack.at[2, :].set(NEG_BIG)
    b_pack = b_pack.at[2, :n_out].set(b3.reshape(-1))

    return (w1_p, w2_p, w3_p, b_pack, int(n_out))


@functools.partial(jax.jit, static_argnames=("n_out", "tile_b"))
def _forward(x, w1_p, w2_p, w3_p, b_pack, *, n_out, tile_b):
    batch, in_size = x.shape
    w_p = w1_p.shape[1]

    # batch tiling: big tiles for HBM-roofline efficiency, but keep >= 2 grid steps
    # when the batch allows so the "parallel" axis shards across v7x's two TCs.
    pad_b = _round_up(batch, 8)
    tb = min(tile_b, pad_b)
    if pad_b // tb < 2 and pad_b >= 16:
        tb = _round_up((pad_b + 1) // 2, 8)
    pad_b = _round_up(pad_b, tb)
    grid = (pad_b // tb,)

    # only pad the batch dim (static no-op when already aligned); x stays f32/unpadded
    # in the feature dim and is cast to bf16 inside the kernel.
    x_p = x if pad_b == batch else jnp.pad(x, ((0, pad_b - batch), (0, 0)))

    out = pl.pallas_call(
        mlp_kernel,
        out_shape=jax.ShapeDtypeStruct((pad_b, n_out), jnp.float32),
        grid=grid,
        in_specs=[
            pl.BlockSpec((tb, in_size), lambda i: (i, 0)),    # x: tiled over batch, true K
            pl.BlockSpec((in_size, w_p), lambda i: (0, 0)),   # w1: VMEM-resident
            pl.BlockSpec((w_p, w_p), lambda i: (0, 0)),       # w2: VMEM-resident
            pl.BlockSpec((w_p, w_p), lambda i: (0, 0)),       # w3: VMEM-resident
            pl.BlockSpec((8, w_p), lambda i: (0, 0)),         # packed biases: resident
        ],
        out_specs=pl.BlockSpec((tb, n_out), lambda i: (i, 0)),  # narrow (n_out-wide) store
        compiler_params=pltpu.CompilerParams(
            dimension_semantics=("parallel",)),
    )(x_p, w1_p, w2_p, w3_p, b_pack)

    return out[:batch]


def mlp_mach1_forward(x, params, *, tile_b=512):
    """params = prepare_params(w1, b1, w2, b2, w3, b3); x: [batch, in_size]."""
    w1_p, w2_p, w3_p, b_pack, n_out = params
    return _forward(x, w1_p, w2_p, w3_p, b_pack, n_out=n_out, tile_b=tile_b)


def init_linear(key, fan_in, fan_out):
    """Deterministic init mimicking nn.Linear defaults.
    Returns W as [in, out] and bias as [out]."""
    kw, kb = jax.random.split(key)
    bound = 1.0 / jnp.sqrt(float(fan_in))
    w = jax.random.uniform(kw, (fan_in, fan_out), jnp.float32, -bound, bound)
    b = jax.random.uniform(kb, (fan_out,), jnp.float32, -bound, bound)
    return w, b


if __name__ == "__main__":
    input_size = 32
    hidden_size = 32
    batch = 8

    key = jax.random.PRNGKey(0)
    kx, k1, k2, k3 = jax.random.split(key, 4)

    x = jax.random.normal(kx, (batch, input_size), jnp.float32)
    w1, b1 = init_linear(k1, input_size, hidden_size)
    w2, b2 = init_linear(k2, hidden_size, hidden_size)
    w3, b3 = init_linear(k3, hidden_size, 2)

    params = prepare_params(w1, b1, w2, b2, w3, b3)   # one-time pad/cast/pack
    out = mlp_mach1_forward(x, params)
    out = jax.block_until_ready(out)

    # reference in plain f32 JAX (kernel uses bf16 matmuls -> loose tolerance)
    def ref(x):
        h = jnp.maximum(x @ w1 + b1, 0.0)
        h = jnp.maximum(h @ w2 + b2, 0.0)
        logits = h @ w3 + b3
        return jax.nn.softmax(logits, axis=1)

    expected = ref(x)
    assert out.shape == (batch, 2)
    assert jnp.allclose(jnp.sum(out, axis=1), 1.0, atol=1e-3)
    assert jnp.allclose(out, expected, atol=2e-2, rtol=0.0)
    print("KERNEL_OK")
</pallas_src>

<mosaic_0001>
module attributes {stable_mosaic.version = 11 : i64} {
  func.func @mlp_kernel(%arg0: i32, %arg1: memref<8x32xf32, #tpu.memory_space<vmem>>, %arg2: memref<32x128xbf16, #tpu.memory_space<vmem>>, %arg3: memref<128x128xbf16, #tpu.memory_space<vmem>>, %arg4: memref<128x128xbf16, #tpu.memory_space<vmem>>, %arg5: memref<8x128xf32, #tpu.memory_space<vmem>>, %arg6: memref<8x2xf32, #tpu.memory_space<vmem>>) attributes {dimension_semantics = [#tpu.dimension_semantics<parallel>], iteration_bounds = array<i64: 1>, scalar_prefetch = 0 : i64, scratch_operands = 0 : i64, tpu.core_type = #tpu.core_type<tc>, window_params = [{transform_indices = @transform_0, window_bounds = array<i64: 8, 32>}, {pipeline_mode = #tpu.pipeline_mode<synchronous>, transform_indices = @transform_1, window_bounds = array<i64: 32, 128>}, {pipeline_mode = #tpu.pipeline_mode<synchronous>, transform_indices = @transform_2, window_bounds = array<i64: 128, 128>}, {pipeline_mode = #tpu.pipeline_mode<synchronous>, transform_indices = @transform_3, window_bounds = array<i64: 128, 128>}, {pipeline_mode = #tpu.pipeline_mode<synchronous>, transform_indices = @transform_4, window_bounds = array<i64: 8, 128>}, {transform_indices = @transform_5, window_bounds = array<i64: 8, 2>}]} {
    %c0 = arith.constant 0 : index
    %c0_0 = arith.constant 0 : index
    %0 = vector.load %arg5[%c0, %c0_0] : memref<8x128xf32, #tpu.memory_space<vmem>>, vector<8x128xf32>
    %c0_1 = arith.constant 0 : index
    %c0_2 = arith.constant 0 : index
    %1 = vector.load %arg1[%c0_1, %c0_2] : memref<8x32xf32, #tpu.memory_space<vmem>>, vector<8x32xf32>
    %2 = arith.truncf %1 : vector<8x32xf32> to vector<8x32xbf16>
    %c0_3 = arith.constant 0 : index
    %c0_4 = arith.constant 0 : index
    %3 = vector.load %arg2[%c0_3, %c0_4] : memref<32x128xbf16, #tpu.memory_space<vmem>>, vector<32x128xbf16>
    %cst = arith.constant dense<0.000000e+00> : vector<8x128xf32>
    %4 = tpu.matmul %2, %3, %cst {dimension_numbers = #tpu.dot_dimension_numbers<[1], [0], [0], [1], [0, 0, 1, 1], [], []>} : vector<8x32xbf16>, vector<32x128xbf16>, vector<8x128xf32> -> vector<8x128xf32>
    %5 = vector.extract_strided_slice %0 {offsets = [0, 0], sizes = [1, 128], strides = [1, 1]} : vector<8x128xf32> to vector<1x128xf32>
    %6 = vector.broadcast %5 : vector<1x128xf32> to vector<8x128xf32>
    %7 = arith.addf %4, %6 : vector<8x128xf32>
    %cst_5 = arith.constant 0.000000e+00 : f32
    %8 = vector.broadcast %cst_5 : f32 to vector<8x128xf32>
    %9 = arith.maximumf %7, %8 : vector<8x128xf32>
    %10 = arith.truncf %9 : vector<8x128xf32> to vector<8x128xbf16>
    %c0_6 = arith.constant 0 : index
    %c0_7 = arith.constant 0 : index
    %11 = vector.load %arg3[%c0_6, %c0_7] : memref<128x128xbf16, #tpu.memory_space<vmem>>, vector<128x128xbf16>
    %cst_8 = arith.constant dense<0.000000e+00> : vector<8x128xf32>
    %12 = tpu.matmul %10, %11, %cst_8 {dimension_numbers = #tpu.dot_dimension_numbers<[1], [0], [0], [1], [0, 0, 1, 1], [], []>} : vector<8x128xbf16>, vector<128x128xbf16>, vector<8x128xf32> -> vector<8x128xf32>
    %13 = vector.extract_strided_slice %0 {offsets = [1, 0], sizes = [1, 128], strides = [1, 1]} : vector<8x128xf32> to vector<1x128xf32>
    %14 = vector.broadcast %13 : vector<1x128xf32> to vector<8x128xf32>
    %15 = arith.addf %12, %14 : vector<8x128xf32>
    %cst_9 = arith.constant 0.000000e+00 : f32
    %16 = vector.broadcast %cst_9 : f32 to vector<8x128xf32>
    %17 = arith.maximumf %15, %16 : vector<8x128xf32>
    %18 = arith.truncf %17 : vector<8x128xf32> to vector<8x128xbf16>
    %c0_10 = arith.constant 0 : index
    %c0_11 = arith.constant 0 : index
    %19 = vector.load %arg4[%c0_10, %c0_11] : memref<128x128xbf16, #tpu.memory_space<vmem>>, vector<128x128xbf16>
    %cst_12 = arith.constant dense<0.000000e+00> : vector<8x128xf32>
    %20 = tpu.matmul %18, %19, %cst_12 {dimension_numbers = #tpu.dot_dimension_numbers<[1], [0], [0], [1], [0, 0, 1, 1], [], []>} : vector<8x128xbf16>, vector<128x128xbf16>, vector<8x128xf32> -> vector<8x128xf32>
    %21 = vector.extract_strided_slice %0 {offsets = [2, 0], sizes = [1, 128], strides = [1, 1]} : vector<8x128xf32> to vector<1x128xf32>
    %22 = vector.broadcast %21 : vector<1x128xf32> to vector<8x128xf32>
    %23 = arith.addf %20, %22 : vector<8x128xf32>
    %cst_13 = arith.constant dense<0xFF800000> : vector<8xf32>
    %24 = vector.multi_reduction <maximumf>, %23, %cst_13 [1] : vector<8x128xf32> to vector<8xf32>
    %25 = vector.shape_cast %24 : vector<8xf32> to vector<8x1xf32>
    %26 = vector.broadcast %25 : vector<8x1xf32> to vector<8x128xf32>
    %27 = arith.subf %23, %26 : vector<8x128xf32>
    %28 = math.exp %27 : vector<8x128xf32>
    %cst_14 = arith.constant dense<0.000000e+00> : vector<8xf32>
    %29 = vector.multi_reduction <add>, %28, %cst_14 [1] : vector<8x128xf32> to vector<8xf32>
    %30 = vector.shape_cast %29 : vector<8xf32> to vector<8x1xf32>
    %31 = vector.broadcast %30 : vector<8x1xf32> to vector<8x128xf32>
    %32 = arith.divf %28, %31 : vector<8x128xf32>
    %33 = vector.extract_strided_slice %32 {offsets = [0, 0], sizes = [8, 2], strides = [1, 1]} : vector<8x128xf32> to vector<8x2xf32>
    %c0_15 = arith.constant 0 : index
    %c0_16 = arith.constant 0 : index
    %34 = vector.load %arg6[%c0_15, %c0_16] : memref<8x2xf32, #tpu.memory_space<vmem>>, vector<8x2xf32>
    tpu.vector_store %arg6[%c0_15, %c0_16], %33 {strides = array<i32>} : memref<8x2xf32, #tpu.memory_space<vmem>>, vector<8x2xf32>,
    return
  }
  func.func @transform_0(%arg0: i32) -> (i32, i32) {
    %c0_i32 = arith.constant 0 : i32
    %c0_i32_0 = arith.constant 0 : i32
    return %arg0, %c0_i32 : i32, i32
  }
  func.func @transform_1(%arg0: i32) -> (i32, i32) {
    %c0_i32 = arith.constant 0 : i32
    %c0_i32_0 = arith.constant 0 : i32
    %c0_i32_1 = arith.constant 0 : i32
    return %c0_i32, %c0_i32_0 : i32, i32
  }
  func.func @transform_2(%arg0: i32) -> (i32, i32) {
    %c0_i32 = arith.constant 0 : i32
    %c0_i32_0 = arith.constant 0 : i32
    %c0_i32_1 = arith.constant 0 : i32
    return %c0_i32, %c0_i32_0 : i32, i32
  }
  func.func @transform_3(%arg0: i32) -> (i32, i32) {
    %c0_i32 = arith.constant 0 : i32
    %c0_i32_0 = arith.constant 0 : i32
    %c0_i32_1 = arith.constant 0 : i32
    return %c0_i32, %c0_i32_0 : i32, i32
  }
  func.func @transform_4(%arg0: i32) -> (i32, i32) {
    %c0_i32 = arith.constant 0 : i32
    %c0_i32_0 = arith.constant 0 : i32
    %c0_i32_1 = arith.constant 0 : i32
    return %c0_i32, %c0_i32_0 : i32, i32
  }
  func.func @transform_5(%arg0: i32) -> (i32, i32) {
    %c0_i32 = arith.constant 0 : i32
    %c0_i32_0 = arith.constant 0 : i32
    return %arg0, %c0_i32 : i32, i32
  }
}

</mosaic_0001>

<llo_original>
// kernel: _forward.1
$region0: #{_forward.1}
  #allocation0 [shape = 'u32[]', space=smem, size = 0x4, offset = 0x4, fixed_abs, tag = 'smem constant byte address 0x4 - core index']
  #allocation1 [shape = 'u32[144,128]{1,0:T(1,128)}', space=vmem, size = 0x12000, scoped, tag = 'internal scratch']
  %s0 = inlined_call_operand.hbm [shape: f32[8,32], index: 0, kind: input, shape index: {}]
  %s1 = inlined_call_operand.hbm [shape: bf16[32,128], index: 1, kind: input, shape index: {}]
  %s2 = inlined_call_operand.hbm [shape: bf16[128,128], index: 2, kind: input, shape index: {}]
  %s3 = inlined_call_operand.hbm [shape: bf16[128,128], index: 3, kind: input, shape index: {}]
  %s4 = inlined_call_operand.vmem [shape: f32[8,128], index: 4, kind: input, shape index: {}]
  %s5 = inlined_call_operand.vmem [shape: f32[8,2], index: 5, kind: output, shape index: {}]
  %s6 = sld [smem:[#allocation0]]
  $region46: #{_forward.1} parent=0
    _
  %s8 = ssub.s32 1, %s6
  %s9 = scalar_select 0, %s8, %s6
  $region1: #{_forward.1} parent=0
    #allocation2 [shape = 'u8[4096]{0}', space=vmem, size = 0x1000, scoped, tag = 'input window, operand 0, single buffered']
    #allocation3 [shape = 's32[1]{0}', space=sflag, size = 0x4, scoped, tag = 'scoped memory for _forward.1']
    #allocation4 [shape = 'u8[8192]{0}', space=vmem, size = 0x2000, scoped, tag = 'input window, operand 1, single buffered']
    #allocation5 [shape = 's32[1]{0}', space=sflag, size = 0x4, scoped, tag = 'scoped memory for _forward.1']
    #allocation6 [shape = 'u8[32768]{0}', space=vmem, size = 0x8000, scoped, tag = 'input window, operand 2, single buffered']
    #allocation7 [shape = 'u8[32768]{0}', space=vmem, size = 0x8000, scoped, tag = 'input window, operand 3, single buffered']
    #allocation8 [shape = 's32[1]{0}', space=sflag, size = 0x4, scoped, tag = 'scoped memory for _forward.1']
    %10 = vsyncpa [#allocation3], 0
    %11 = vsyncpa [#allocation5], 0
    %12 = vsyncpa [#allocation8], 0
    // Predicated region
    $region2: #{_forward.1} parent=1 // pred_check
      _
    $region3: #{_forward.1} parent=1 // pred_check_branch
      %14 = sbr.rel (0) target = $region5
    $region4: #{_forward.1} parent=1 // pred_region
      %s16 = ssub.s32 128, 128
      %17 = vsyncadd [#allocation3], %s16
      %s19 = sshll.u32 [#allocation2], 4
      %s20 = int_to_ptr.vmem [resolvable:$true] %s19
      %22 = dma.hbm_to_vmem [thread:$0]  %s0, 128, %s20, [#allocation3]
    $region5: #{_forward.1} parent=1 // pred_fallthru
      _
    // Predicated region
    $region6: #{_forward.1} parent=1 // pred_check
      _
    $region7: #{_forward.1} parent=1 // pred_check_branch
      %24 = sbr.rel (0) target = $region9
    $region8: #{_forward.1} parent=1 // pred_region
      %s26 = ssub.s32 256, 256
      %27 = vsyncadd [#allocation5], %s26
      %s28 = sshll.u32 [#allocation4], 4
      %s29 = int_to_ptr.vmem [resolvable:$true] %s28
      %34 = dma.hbm_to_vmem [thread:$0]  %s1, 256, %s29, [#allocation5], 64, 64, 4
    $region9: #{_forward.1} parent=1 // pred_fallthru
      _
    // Predicated region
    $region10: #{_forward.1} parent=1 // pred_check
      _
    $region11: #{_forward.1} parent=1 // pred_check_branch
      %36 = sbr.rel (0) target = $region13
    $region12: #{_forward.1} parent=1 // pred_region
      %s38 = ssub.s32 1024, 1024
      %39 = vsyncadd [#allocation5], %s38
      %s40 = sshll.u32 [#allocation6], 4
      %s41 = int_to_ptr.vmem [resolvable:$true] %s40
      %46 = dma.hbm_to_vmem [thread:$0]  %s2, 1024, %s41, [#allocation5], 64, 64, 4
    $region13: #{_forward.1} parent=1 // pred_fallthru
      _
    // Predicated region
    $region14: #{_forward.1} parent=1 // pred_check
      _
    $region15: #{_forward.1} parent=1 // pred_check_branch
      %48 = sbr.rel (0) target = $region17
    $region16: #{_forward.1} parent=1 // pred_region
      %s50 = ssub.s32 1024, 1024
      %51 = vsyncadd [#allocation8], %s50
      %s52 = sshll.u32 [#allocation7], 4
      %s53 = int_to_ptr.vmem [resolvable:$true] %s52
      %58 = dma.hbm_to_vmem [thread:$0]  %s3, 1024, %s53, [#allocation8], 64, 64, 4
    $region17: #{_forward.1} parent=1 // pred_fallthru
      _
    // Predicated region
    $region18: #{_forward.1} parent=1 // pred_check
      _
    $region19: #{_forward.1} parent=1 // pred_check_branch
      %60 = sbr.rel (0) target = $region21
    $region20: #{_forward.1} parent=1 // pred_region
      _
    $region21: #{_forward.1} parent=1 // pred_fallthru
      _
    // Predicated region
    $region22: #{_forward.1} parent=1 // pred_check
      _
    $region23: #{_forward.1} parent=1 // pred_check_branch
      %62 = sbr.rel (0) target = $region25
    $region24: #{_forward.1} parent=1 // pred_region
      %63 = dma.done [#allocation3], 128
    $region25: #{_forward.1} parent=1 // pred_fallthru
      _
    // Predicated region
    $region26: #{_forward.1} parent=1 // pred_check
      _
    $region27: #{_forward.1} parent=1 // pred_check_branch
      %65 = sbr.rel (0) target = $region29
    $region28: #{_forward.1} parent=1 // pred_region
      %66 = dma.done [#allocation5], 256
    $region29: #{_forward.1} parent=1 // pred_fallthru
      _
    // Predicated region
    $region30: #{_forward.1} parent=1 // pred_check
      _
    $region31: #{_forward.1} parent=1 // pred_check_branch
      %68 = sbr.rel (0) target = $region33
    $region32: #{_forward.1} parent=1 // pred_region
      %69 = dma.done [#allocation5], 1024
    $region33: #{_forward.1} parent=1 // pred_fallthru
      _
    // Predicated region
    $region34: #{_forward.1} parent=1 // pred_check
      _
    $region35: #{_forward.1} parent=1 // pred_check_branch
      %71 = sbr.rel (0) target = $region37
    $region36: #{_forward.1} parent=1 // pred_region
      %72 = dma.done [#allocation8], 1024
    $region37: #{_forward.1} parent=1 // pred_fallthru
      _
    %v74 = vld [vmem:[%s4] sm:$0xff]
    %v75 = vld [vmem:[#allocation2] sm:$0xff]
    %v76 = vpack.c.bf16 %v75, %v75
    %v77 = vld [vmem:[#allocation4] sm:$0xf]
    %v78 = vld [vmem:[#allocation4 + $0x4] sm:$0xf]
    %v79 = vld [vmem:[#allocation4 + $0x8] sm:$0xf]
    %v80 = vld [vmem:[#allocation4 + $0xc] sm:$0xf]
    %v81 = vlaneseq
    %v82 = vshrl.u32 %v81, 7
    %v83 = vsub.s32 0, %v82
    %v84 = vrot.slane %v74, %v83
    %v89 = vunpack.c.l.b16 %v77
    %v90 = vunpack.c.l.b16 %v78
    %v91 = vunpack.c.l.b16 %v79
    %v92 = vunpack.c.l.b16 %v80
    %v93 = vpack.c.b16 %v90, %v89
    %v94 = vpack.c.b16 %v92, %v91
    %vm97 = vcmask 261120
    %v99 = vsel %vm97, %v76, 0
    %101 = vmatprep.subr.bf16.mxu0 0
    %102 = vmatpush1.bf16.msra.mxu0 %v93
    %103 = vmatprep.subr.bf16.mxu0 0
    %104 = vmatpush1.bf16.msra.mxu0 %v94
    %105 = vmatprep.subr.bf16.mxu0 0
    %106 = vmatpush1.bf16.msra.mxu0 0
    %107 = vmatprep.subr.bf16.mxu0 0
    %108 = vmatpush1.bf16.msra.mxu0 0
    %109 = vmatprep.subr.bf16.mxu0 0
    %110 = vmatpush1.bf16.msra.mxu0 0
    %111 = vmatprep.subr.bf16.mxu0 0
    %112 = vmatpush1.bf16.msra.mxu0 0
    %113 = vmatprep.subr.bf16.mxu0 0
    %114 = vmatpush1.bf16.msra.mxu0 0
    %115 = vmatprep.subr.bf16.mxu0 0
    %116 = vmatpush1.bf16.msra.mxu0 0
    %117 = vmatprep.subr.bf16.mxu0 0
    %118 = vmatpush1.bf16.msra.mxu0 0
    %119 = vmatprep.subr.bf16.mxu0 0
    %120 = vmatpush1.bf16.msra.mxu0 0
    %121 = vmatprep.subr.bf16.mxu0 0
    %122 = vmatpush1.bf16.msra.mxu0 0
    %123 = vmatprep.subr.bf16.mxu0 0
    %124 = vmatpush1.bf16.msra.mxu0 0
    %125 = vmatprep.subr.bf16.mxu0 0
    %126 = vmatpush1.bf16.msra.mxu0 0
    %127 = vmatprep.subr.bf16.mxu0 0
    %128 = vmatpush1.bf16.msra.mxu0 0
    %129 = vmatprep.subr.bf16.mxu0 0
    %130 = vmatpush1.bf16.msra.mxu0 0
    %131 = vmatprep.subr.bf16.mxu0 0
    %132 = vmatpush1.bf16.msra.mxu0 0
    %133 = vmatprep.mubr.bf16.mxu0 0
    %134 = vmatmul.mubr.bf16.gmra.mrb[0].mxu0 %v99
    %v135 = vpop.f32.mrb[0].mxu0
    %v136 = vadd.f32 %v84, %v135
    %v137 = vpop.f32.mrb[0].mxu0
    %v138 = vpop.f32.mrb[0].mxu0
    %v139 = vpop.f32.mrb[0].mxu0
    %140 = vdwg.mxu0
    %v141 = vmax.f32 %v136, 0.0
    %v142 = vpack.c.bf16 %v141, %v141
    %v143 = vld [vmem:[#allocation6] sm:$0xf]
    %v144 = vld [vmem:[#allocation6 + $0x4] sm:$0xf]
    %v145 = vld [vmem:[#allocation6 + $0x8] sm:$0xf]
    %v146 = vld [vmem:[#allocation6 + $0xc] sm:$0xf]
    %v147 = vld [vmem:[#allocation6 + $0x10] sm:$0xf]
    %v148 = vld [vmem:[#allocation6 + $0x14] sm:$0xf]
    %v149 = vld [vmem:[#allocation6 + $0x18] sm:$0xf]
    %v150 = vld [vmem:[#allocation6 + $0x1c] sm:$0xf]
    %v151 = vld [vmem:[#allocation6 + $0x20] sm:$0xf]
    %v152 = vld [vmem:[#allocation6 + $0x24] sm:$0xf]
    %v153 = vld [vmem:[#allocation6 + $0x28] sm:$0xf]
    %v154 = vld [vmem:[#allocation6 + $0x2c] sm:$0xf]
    %v155 = vld [vmem:[#allocation6 + $0x30] sm:$0xf]
    %v156 = vld [vmem:[#allocation6 + $0x34] sm:$0xf]
    %v157 = vld [vmem:[#allocation6 + $0x38] sm:$0xf]
    %v158 = vld [vmem:[#allocation6 + $0x3c] sm:$0xf]
    %v159 = vlaneseq
    %v160 = vshrl.u32 %v159, 7
    %v161 = vsub.s32 1, %v160
    %v162 = vrot.slane %v74, %v161
    %v179 = vunpack.c.l.b16 %v143
    %v180 = vunpack.c.l.b16 %v144
    %v181 = vunpack.c.l.b16 %v145
    %v182 = vunpack.c.l.b16 %v146
    %v183 = vunpack.c.l.b16 %v147
    %v184 = vunpack.c.l.b16 %v148
    %v185 = vunpack.c.l.b16 %v149
    %v186 = vunpack.c.l.b16 %v150
    %v187 = vunpack.c.l.b16 %v151
    %v188 = vunpack.c.l.b16 %v152
    %v189 = vunpack.c.l.b16 %v153
    %v190 = vunpack.c.l.b16 %v154
    %v191 = vunpack.c.l.b16 %v155
    %v192 = vunpack.c.l.b16 %v156
    %v193 = vunpack.c.l.b16 %v157
    %v194 = vunpack.c.l.b16 %v158
    %v195 = vpack.c.b16 %v180, %v179
    %v196 = vpack.c.b16 %v182, %v181
    %v197 = vpack.c.b16 %v184, %v183
    %v198 = vpack.c.b16 %v186, %v185
    %v199 = vpack.c.b16 %v188, %v187
    %v200 = vpack.c.b16 %v190, %v189
    %v201 = vpack.c.b16 %v192, %v191
    %v202 = vpack.c.b16 %v194, %v193
    %211 = vmatprep.subr.bf16.mxu0 0
    %212 = vmatpush1.bf16.msra.mxu0 %v195
    %213 = vmatprep.subr.bf16.mxu0 0
    %214 = vmatpush1.bf16.msra.mxu0 %v196
    %215 = vmatprep.subr.bf16.mxu0 0
    %216 = vmatpush1.bf16.msra.mxu0 %v197
    %217 = vmatprep.subr.bf16.mxu0 0
    %218 = vmatpush1.bf16.msra.mxu0 %v198
    %219 = vmatprep.subr.bf16.mxu0 0
    %220 = vmatpush1.bf16.msra.mxu0 %v199
    %221 = vmatprep.subr.bf16.mxu0 0
    %222 = vmatpush1.bf16.msra.mxu0 %v200
    %223 = vmatprep.subr.bf16.mxu0 0
    %224 = vmatpush1.bf16.msra.mxu0 %v201
    %225 = vmatprep.subr.bf16.mxu0 0
    %226 = vmatpush1.bf16.msra.mxu0 %v202
    %227 = vmatprep.subr.bf16.mxu0 0
    %228 = vmatpush1.bf16.msra.mxu0 0
    %229 = vmatprep.subr.bf16.mxu0 0
    %230 = vmatpush1.bf16.msra.mxu0 0
    %231 = vmatprep.subr.bf16.mxu0 0
    %232 = vmatpush1.bf16.msra.mxu0 0
    %233 = vmatprep.subr.bf16.mxu0 0
    %234 = vmatpush1.bf16.msra.mxu0 0
    %235 = vmatprep.subr.bf16.mxu0 0
    %236 = vmatpush1.bf16.msra.mxu0 0
    %237 = vmatprep.subr.bf16.mxu0 0
    %238 = vmatpush1.bf16.msra.mxu0 0
    %239 = vmatprep.subr.bf16.mxu0 0
    %240 = vmatpush1.bf16.msra.mxu0 0
    %241 = vmatprep.subr.bf16.mxu0 0
    %242 = vmatpush1.bf16.msra.mxu0 0
    %243 = vmatprep.mubr.bf16.mxu0 0
    %244 = vmatmul.mubr.bf16.gmra.mrb[0].mxu0 %v142
    %v245 = vpop.f32.mrb[0].mxu0
    %v246 = vadd.f32 %v162, %v245
    %v247 = vpop.f32.mrb[0].mxu0
    %v248 = vpop.f32.mrb[0].mxu0
    %v249 = vpop.f32.mrb[0].mxu0
    %250 = vdwg.mxu0
    %v251 = vmax.f32 %v246, 0.0
    %v252 = vpack.c.bf16 %v251, %v251
    %v253 = vld [vmem:[#allocation7] sm:$0xf]
    %v254 = vld [vmem:[#allocation7 + $0x4] sm:$0xf]
    %v255 = vld [vmem:[#allocation7 + $0x8] sm:$0xf]
    %v256 = vld [vmem:[#allocation7 + $0xc] sm:$0xf]
    %v257 = vld [vmem:[#allocation7 + $0x10] sm:$0xf]
    %v258 = vld [vmem:[#allocation7 + $0x14] sm:$0xf]
    %v259 = vld [vmem:[#allocation7 + $0x18] sm:$0xf]
    %v260 = vld [vmem:[#allocation7 + $0x1c] sm:$0xf]
    %v261 = vld [vmem:[#allocation7 + $0x20] sm:$0xf]
    %v262 = vld [vmem:[#allocation7 + $0x24] sm:$0xf]
    %v263 = vld [vmem:[#allocation7 + $0x28] sm:$0xf]
    %v264 = vld [vmem:[#allocation7 + $0x2c] sm:$0xf]
    %v265 = vld [vmem:[#allocation7 + $0x30] sm:$0xf]
    %v266 = vld [vmem:[#allocation7 + $0x34] sm:$0xf]
    %v267 = vld [vmem:[#allocation7 + $0x38] sm:$0xf]
    %v268 = vld [vmem:[#allocation7 + $0x3c] sm:$0xf]
    %v269 = vlaneseq
    %v270 = vshrl.u32 %v269, 7
    %v271 = vsub.s32 2, %v270
    %v272 = vrot.slane %v74, %v271
    %v289 = vunpack.c.l.b16 %v253
    %v290 = vunpack.c.l.b16 %v254
    %v291 = vunpack.c.l.b16 %v255
    %v292 = vunpack.c.l.b16 %v256
    %v293 = vunpack.c.l.b16 %v257
    %v294 = vunpack.c.l.b16 %v258
    %v295 = vunpack.c.l.b16 %v259
    %v296 = vunpack.c.l.b16 %v260
    %v297 = vunpack.c.l.b16 %v261
    %v298 = vunpack.c.l.b16 %v262
    %v299 = vunpack.c.l.b16 %v263
    %v300 = vunpack.c.l.b16 %v264
    %v301 = vunpack.c.l.b16 %v265
    %v302 = vunpack.c.l.b16 %v266
    %v303 = vunpack.c.l.b16 %v267
    %v304 = vunpack.c.l.b16 %v268
    %v305 = vpack.c.b16 %v290, %v289
    %v306 = vpack.c.b16 %v292, %v291
    %v307 = vpack.c.b16 %v294, %v293
    %v308 = vpack.c.b16 %v296, %v295
    %v309 = vpack.c.b16 %v298, %v297
    %v310 = vpack.c.b16 %v300, %v299
    %v311 = vpack.c.b16 %v302, %v301
    %v312 = vpack.c.b16 %v304, %v303
    %321 = vmatprep.subr.bf16.mxu0 0
    %322 = vmatpush1.bf16.msra.mxu0 %v305
    %323 = vmatprep.subr.bf16.mxu0 0
    %324 = vmatpush1.bf16.msra.mxu0 %v306
    %325 = vmatprep.subr.bf16.mxu0 0
    %326 = vmatpush1.bf16.msra.mxu0 %v307
    %327 = vmatprep.subr.bf16.mxu0 0
    %328 = vmatpush1.bf16.msra.mxu0 %v308
    %329 = vmatprep.subr.bf16.mxu0 0
    %330 = vmatpush1.bf16.msra.mxu0 %v309
    %331 = vmatprep.subr.bf16.mxu0 0
    %332 = vmatpush1.bf16.msra.mxu0 %v310
    %333 = vmatprep.subr.bf16.mxu0 0
    %334 = vmatpush1.bf16.msra.mxu0 %v311
    %335 = vmatprep.subr.bf16.mxu0 0
    %336 = vmatpush1.bf16.msra.mxu0 %v312
    %337 = vmatprep.subr.bf16.mxu0 0
    %338 = vmatpush1.bf16.msra.mxu0 0
    %339 = vmatprep.subr.bf16.mxu0 0
    %340 = vmatpush1.bf16.msra.mxu0 0
    %341 = vmatprep.subr.bf16.mxu0 0
    %342 = vmatpush1.bf16.msra.mxu0 0
    %343 = vmatprep.subr.bf16.mxu0 0
    %344 = vmatpush1.bf16.msra.mxu0 0
    %345 = vmatprep.subr.bf16.mxu0 0
    %346 = vmatpush1.bf16.msra.mxu0 0
    %347 = vmatprep.subr.bf16.mxu0 0
    %348 = vmatpush1.bf16.msra.mxu0 0
    %349 = vmatprep.subr.bf16.mxu0 0
    %350 = vmatpush1.bf16.msra.mxu0 0
    %351 = vmatprep.subr.bf16.mxu0 0
    %352 = vmatpush1.bf16.msra.mxu0 0
    %353 = vmatprep.mubr.bf16.mxu0 0
    %354 = vmatmul.mubr.bf16.gmra.mrb[0].mxu0 %v252
    %v355 = vpop.f32.mrb[0].mxu0
    %v356 = vadd.f32 %v272, %v355
    %v357 = vpop.f32.mrb[0].mxu0
    %v358 = vpop.f32.mrb[0].mxu0
    %v359 = vpop.f32.mrb[0].mxu0
    %360 = vdwg.mxu0
    %361 = vmax.xlane.f32.xlu0 %v356
    %v362 = vpop.xlane.xlu0 %361
    %v363 = vsub.f32 %v356, %v362
    %v364 = vmul.f32 %v363, 1.442695
    %v365 = vpow.pop %v364
    %366 = vadd.xlane.f32.xlu0 %v365
    %v367 = vpop.xlane.xlu0 %366
    %v368 = vrcp.pop %v367
    %v369 = vmul.f32 %v365, %v368
    %vm370 = vcmask 15360
    %371 = vst.msk [vmem:[%s5] sm:$0xff] %vm370, %v369
    // Predicated region
    $region38: #{_forward.1} parent=1 // pred_check
      _
    $region39: #{_forward.1} parent=1 // pred_check_branch
      %373 = sbr.rel (0) target = $region41
    $region40: #{_forward.1} parent=1 // pred_region
      _
    $region41: #{_forward.1} parent=1 // pred_fallthru
      _
    // Predicated region
    $region42: #{_forward.1} parent=1 // pred_check
      _
    $region43: #{_forward.1} parent=1 // pred_check_branch
      %375 = sbr.rel (0) target = $region45
    $region44: #{_forward.1} parent=1 // pred_region
      _
    $region45: #{_forward.1} parent=1 // pred_fallthru
      _
    %376 = vsyncpa [#allocation3], 1
    %377 = vsyncpa [#allocation5], 1
    %378 = vsyncpa [#allocation8], 1

</llo_original>
